<compile_context>
chip_gen: v7x
topology: tpu7x:2x2x1
jax: 0.10.0
libtpu: 0.0.40
codegen_flags: <defaults>
</compile_context>

<pallas_src>
import functools

import numpy as np
import jax
import jax.numpy as jnp
from jax.experimental import pallas as pl
from jax.experimental.pallas import tpu as pltpu


def _softplus(x):
    # Matches torch.nn.Softplus(beta=1, threshold=20): linear for x > 20.
    safe = jnp.minimum(x, 20.0)
    return jnp.where(x > 20.0, x, jnp.log1p(jnp.exp(safe)))


def policy_kernel(x_ref, w1_ref, b1_ref, wh_ref, bh_ref, out_ref, *, a_dim):
    # x_ref:  [TB, D_in]  (bf16)      w1_ref: [D_in, H] (bf16)   b1_ref: [1, H]   (f32)
    # wh_ref: [H, W_out]  (bf16)      bh_ref: [1, W_out] (f32)   out_ref:[TB, W_out] (f32)
    x = x_ref[...]

    # Hidden layer: Linear + ReLU (MXU matmul, f32 accumulation; elementwise in f32).
    h = jnp.dot(x, w1_ref[...], preferred_element_type=jnp.float32) + b1_ref[...]
    h = jnp.maximum(h, 0.0)

    # Fused head: [mu | std_pre | zero-pad] in one lane-dense matmul.
    pre = jnp.dot(h.astype(wh_ref.dtype), wh_ref[...],
                  preferred_element_type=jnp.float32) + bh_ref[...]

    # Apply softplus only on the std columns; mu and pad columns pass through.
    col = jax.lax.broadcasted_iota(jnp.int32, pre.shape, 1)
    is_std = jnp.logical_and(col >= a_dim, col < 2 * a_dim)
    out_ref[...] = jnp.where(is_std, _softplus(pre), pre).astype(out_ref.dtype)


def continuous_policy_forward(s, params, state_shape, action_shape, tb_max=2048):
    """s: any shape that flattens to [-1, prod(state_shape)]. Returns (mu, std)."""
    d_in = int(np.prod(state_shape))
    a_dim = int(np.prod(action_shape))
    x = jnp.reshape(s, (-1, d_in)).astype(jnp.float32)
    B = x.shape[0]

    w1, b1, w2, b2, wmu, bmu, wstd, bstd = params
    H = w1.shape[1]

    # --- Fold the linear MLP output layer into the heads (exact composition). ---
    wmu_f = w2 @ wmu                     # [H, a_dim]
    bmu_f = b2 @ wmu + bmu               # [1, a_dim]
    wstd_f = w2 @ wstd
    bstd_f = b2 @ wstd + bstd

    # --- Fuse heads + zero-pad output features to a lane-dense multiple of 128. ---
    out_w = max(128, int(-(-(2 * a_dim) // 128)) * 128)
    w_head = jnp.zeros((H, out_w), jnp.float32)
    w_head = w_head.at[:, :a_dim].set(wmu_f).at[:, a_dim:2 * a_dim].set(wstd_f)
    b_head = jnp.zeros((1, out_w), jnp.float32)
    b_head = b_head.at[:, :a_dim].set(bmu_f).at[:, a_dim:2 * a_dim].set(bstd_f)

    # bf16 matmul inputs, f32 accumulation / biases.
    x_bf = x.astype(jnp.bfloat16)
    w1_bf = w1.astype(jnp.bfloat16)
    wh_bf = w_head.astype(jnp.bfloat16)
    b1_f32 = b1.astype(jnp.float32)
    bh_f32 = b_head.astype(jnp.float32)

    # --- Batch tiling: TB multiple of 256 for big B (MXU-friendly), tiny tile otherwise.
    if B >= tb_max:
        tb = tb_max
    else:
        tb = max(8, int(-(-B // 8)) * 8)
    b_pad = int(pl.cdiv(B, tb)) * tb
    if b_pad != B:
        x_bf = jnp.pad(x_bf, ((0, b_pad - B), (0, 0)))
    grid = (b_pad // tb,)

    slab = pl.pallas_call(
        functools.partial(policy_kernel, a_dim=a_dim),
        out_shape=jax.ShapeDtypeStruct((b_pad, out_w), jnp.float32),
        grid=grid,
        in_specs=[
            pl.BlockSpec((tb, d_in), lambda i: (i, 0)),      # x: streamed per tile
            pl.BlockSpec((d_in, H), lambda i: (0, 0)),       # W1: resident
            pl.BlockSpec((1, H), lambda i: (0, 0)),          # b1: resident
            pl.BlockSpec((H, out_w), lambda i: (0, 0)),      # fused head weight: resident
            pl.BlockSpec((1, out_w), lambda i: (0, 0)),      # fused head bias: resident
        ],
        out_specs=pl.BlockSpec((tb, out_w), lambda i: (i, 0)),
        compiler_params=pltpu.CompilerParams(
            dimension_semantics=("parallel",)),
    )(x_bf, w1_bf, b1_f32, wh_bf, bh_f32)

    mu = jnp.reshape(slab[:B, :a_dim], (-1,) + tuple(action_shape))
    std = jnp.reshape(slab[:B, a_dim:2 * a_dim], (-1,) + tuple(action_shape))
    return mu, std


def continuous_policy_reference(s, params, state_shape, action_shape):
    """Pure-JAX f32 reference (mirrors the PyTorch module)."""
    d_in = int(np.prod(state_shape))
    a_dim = int(np.prod(action_shape))
    x = jnp.reshape(s, (-1, d_in)).astype(jnp.float32)
    w1, b1, w2, b2, wmu, bmu, wstd, bstd = params
    h = jnp.maximum(x @ w1 + b1, 0.0)
    f = h @ w2 + b2
    mu = f @ wmu + bmu
    std = _softplus(f @ wstd + bstd)
    return (jnp.reshape(mu, (-1,) + tuple(action_shape)),
            jnp.reshape(std, (-1,) + tuple(action_shape)))


def init_params(key, state_shape, action_shape, hidden_dims=(32,)):
    """Deterministic init. Weights stored as [in, out]; biases as [1, out]."""
    d_in = int(np.prod(state_shape))
    h = hidden_dims[-1]
    a_dim = int(np.prod(action_shape))

    keys = jax.random.split(key, 8)

    def linear(kw, kb, fan_in, fan_out):
        bound = 1.0 / np.sqrt(fan_in)
        w = jax.random.uniform(kw, (fan_in, fan_out), jnp.float32, -bound, bound)
        b = jax.random.uniform(kb, (1, fan_out), jnp.float32, -bound, bound)
        return w, b

    w1, b1 = linear(keys[0], keys[1], d_in, hidden_dims[0])     # hidden layer
    w2, b2 = linear(keys[2], keys[3], hidden_dims[0], h)        # MLP output layer
    wmu, bmu = linear(keys[4], keys[5], h, a_dim)               # mu head
    wstd, bstd = linear(keys[6], keys[7], h, a_dim)             # std head
    return (w1, b1, w2, b2, wmu, bmu, wstd, bstd)


if __name__ == "__main__":
    state_shape = (16,)      # 1-D observation -> MLP branch
    action_shape = (4,)
    hidden_dims = (32,)
    batch = 2

    key = jax.random.PRNGKey(0)
    k_params, k_x = jax.random.split(key)

    params = init_params(k_params, state_shape, action_shape, hidden_dims)
    s = jax.random.normal(k_x, (batch,) + state_shape, dtype=jnp.float32)

    mu, std = continuous_policy_forward(s, params, state_shape, action_shape)
    jax.block_until_ready((mu, std))

    assert mu.shape == (batch,) + action_shape
    assert std.shape == (batch,) + action_shape
    assert bool(jnp.all(std > 0.0))    # softplus output must be positive

    # Correctness vs pure-JAX f32 reference (loose tolerance: bf16 matmul inputs).
    mu_ref, std_ref = continuous_policy_reference(s, params, state_shape, action_shape)
    assert bool(jnp.max(jnp.abs(mu - mu_ref)) < 5e-2)
    assert bool(jnp.max(jnp.abs(std - std_ref)) < 5e-2)

    print("KERNEL_OK")
</pallas_src>

<mosaic_0001>
module attributes {stable_mosaic.version = 11 : i64} {
  func.func @policy_kernel(%arg0: i32, %arg1: memref<8x16xbf16, #tpu.memory_space<vmem>>, %arg2: memref<16x32xbf16, #tpu.memory_space<vmem>>, %arg3: memref<1x32xf32, #tpu.memory_space<vmem>>, %arg4: memref<32x128xbf16, #tpu.memory_space<vmem>>, %arg5: memref<1x128xf32, #tpu.memory_space<vmem>>, %arg6: memref<8x128xf32, #tpu.memory_space<vmem>>) attributes {dimension_semantics = [#tpu.dimension_semantics<parallel>], iteration_bounds = array<i64: 1>, scalar_prefetch = 0 : i64, scratch_operands = 0 : i64, tpu.core_type = #tpu.core_type<tc>, window_params = [{transform_indices = @transform_0, window_bounds = array<i64: 8, 16>}, {pipeline_mode = #tpu.pipeline_mode<synchronous>, transform_indices = @transform_1, window_bounds = array<i64: 16, 32>}, {pipeline_mode = #tpu.pipeline_mode<synchronous>, transform_indices = @transform_2, window_bounds = array<i64: 1, 32>}, {pipeline_mode = #tpu.pipeline_mode<synchronous>, transform_indices = @transform_3, window_bounds = array<i64: 32, 128>}, {pipeline_mode = #tpu.pipeline_mode<synchronous>, transform_indices = @transform_4, window_bounds = array<i64: 1, 128>}, {transform_indices = @transform_5, window_bounds = array<i64: 8, 128>}]} {
    %c0 = arith.constant 0 : index
    %c0_0 = arith.constant 0 : index
    %0 = vector.load %arg1[%c0, %c0_0] : memref<8x16xbf16, #tpu.memory_space<vmem>>, vector<8x16xbf16>
    %c0_1 = arith.constant 0 : index
    %c0_2 = arith.constant 0 : index
    %1 = vector.load %arg2[%c0_1, %c0_2] : memref<16x32xbf16, #tpu.memory_space<vmem>>, vector<16x32xbf16>
    %cst = arith.constant dense<0.000000e+00> : vector<8x32xf32>
    %2 = tpu.matmul %0, %1, %cst {dimension_numbers = #tpu.dot_dimension_numbers<[1], [0], [0], [1], [0, 0, 1, 1], [], []>} : vector<8x16xbf16>, vector<16x32xbf16>, vector<8x32xf32> -> vector<8x32xf32>
    %c0_3 = arith.constant 0 : index
    %c0_4 = arith.constant 0 : index
    %3 = vector.load %arg3[%c0_3, %c0_4] : memref<1x32xf32, #tpu.memory_space<vmem>>, vector<1x32xf32>
    %4 = vector.broadcast %3 : vector<1x32xf32> to vector<8x32xf32>
    %5 = arith.addf %2, %4 : vector<8x32xf32>
    %cst_5 = arith.constant 0.000000e+00 : f32
    %6 = vector.broadcast %cst_5 : f32 to vector<8x32xf32>
    %7 = arith.maximumf %5, %6 : vector<8x32xf32>
    %8 = arith.truncf %7 : vector<8x32xf32> to vector<8x32xbf16>
    %c0_6 = arith.constant 0 : index
    %c0_7 = arith.constant 0 : index
    %9 = vector.load %arg4[%c0_6, %c0_7] : memref<32x128xbf16, #tpu.memory_space<vmem>>, vector<32x128xbf16>
    %cst_8 = arith.constant dense<0.000000e+00> : vector<8x128xf32>
    %10 = tpu.matmul %8, %9, %cst_8 {dimension_numbers = #tpu.dot_dimension_numbers<[1], [0], [0], [1], [0, 0, 1, 1], [], []>} : vector<8x32xbf16>, vector<32x128xbf16>, vector<8x128xf32> -> vector<8x128xf32>
    %c0_9 = arith.constant 0 : index
    %c0_10 = arith.constant 0 : index
    %11 = vector.load %arg5[%c0_9, %c0_10] : memref<1x128xf32, #tpu.memory_space<vmem>>, vector<1x128xf32>
    %12 = vector.broadcast %11 : vector<1x128xf32> to vector<8x128xf32>
    %13 = arith.addf %10, %12 : vector<8x128xf32>
    %14 = tpu.iota {dimensions = array<i32: 1>} : vector<8x128xi32>
    %c4_i32 = arith.constant 4 : i32
    %15 = vector.broadcast %c4_i32 : i32 to vector<8x128xi32>
    %16 = arith.cmpi sge, %14, %15 : vector<8x128xi32>
    %c8_i32 = arith.constant 8 : i32
    %17 = vector.broadcast %c8_i32 : i32 to vector<8x128xi32>
    %18 = arith.cmpi slt, %14, %17 : vector<8x128xi32>
    %19 = arith.andi %16, %18 : vector<8x128xi1>
    %cst_11 = arith.constant 2.000000e+01 : f32
    %20 = vector.broadcast %cst_11 : f32 to vector<8x128xf32>
    %21 = arith.minimumf %13, %20 : vector<8x128xf32>
    %cst_12 = arith.constant 2.000000e+01 : f32
    %22 = vector.broadcast %cst_12 : f32 to vector<8x128xf32>
    %23 = arith.cmpf ogt, %13, %22 : vector<8x128xf32>
    %24 = math.exp %21 : vector<8x128xf32>
    %25 = math.log1p %24 : vector<8x128xf32>
    %26 = arith.select %23, %13, %25 : vector<8x128xi1>, vector<8x128xf32>
    %27 = arith.select %19, %26, %13 : vector<8x128xi1>, vector<8x128xf32>
    %c0_13 = arith.constant 0 : index
    %c0_14 = arith.constant 0 : index
    %28 = vector.load %arg6[%c0_13, %c0_14] : memref<8x128xf32, #tpu.memory_space<vmem>>, vector<8x128xf32>
    tpu.vector_store %arg6[%c0_13, %c0_14], %27 {strides = array<i32>} : memref<8x128xf32, #tpu.memory_space<vmem>>, vector<8x128xf32>,
    return
  }
  func.func @transform_0(%arg0: i32) -> (i32, i32) {
    %c0_i32 = arith.constant 0 : i32
    %c0_i32_0 = arith.constant 0 : i32
    return %arg0, %c0_i32 : i32, i32
  }
  func.func @transform_1(%arg0: i32) -> (i32, i32) {
    %c0_i32 = arith.constant 0 : i32
    %c0_i32_0 = arith.constant 0 : i32
    %c0_i32_1 = arith.constant 0 : i32
    return %c0_i32, %c0_i32_0 : i32, i32
  }
  func.func @transform_2(%arg0: i32) -> (i32, i32) {
    %c0_i32 = arith.constant 0 : i32
    %c0_i32_0 = arith.constant 0 : i32
    %c0_i32_1 = arith.constant 0 : i32
    return %c0_i32, %c0_i32_0 : i32, i32
  }
  func.func @transform_3(%arg0: i32) -> (i32, i32) {
    %c0_i32 = arith.constant 0 : i32
    %c0_i32_0 = arith.constant 0 : i32
    %c0_i32_1 = arith.constant 0 : i32
    return %c0_i32, %c0_i32_0 : i32, i32
  }
  func.func @transform_4(%arg0: i32) -> (i32, i32) {
    %c0_i32 = arith.constant 0 : i32
    %c0_i32_0 = arith.constant 0 : i32
    %c0_i32_1 = arith.constant 0 : i32
    return %c0_i32, %c0_i32_0 : i32, i32
  }
  func.func @transform_5(%arg0: i32) -> (i32, i32) {
    %c0_i32 = arith.constant 0 : i32
    %c0_i32_0 = arith.constant 0 : i32
    return %arg0, %c0_i32 : i32, i32
  }
}

</mosaic_0001>

<llo_original>
// kernel: tpu_custom_call.1
$region0: #{tpu_custom_call.1}
  #allocation0 [shape = 'u32[]', space=smem, size = 0x4, offset = 0x4, fixed_abs, tag = 'smem constant byte address 0x4 - core index']
  #allocation1 [shape = 'u32[144,128]{1,0:T(1,128)}', space=vmem, size = 0x12000, scoped, tag = 'internal scratch']
  %s0 = inlined_call_operand.hbm [shape: bf16[8,16], index: 0, kind: input, shape index: {}]
  %s1 = inlined_call_operand.hbm [shape: bf16[16,32], index: 1, kind: input, shape index: {}]
  %s2 = inlined_call_operand.vmem [shape: f32[1,32], index: 2, kind: input, shape index: {}]
  %s3 = inlined_call_operand.hbm [shape: bf16[32,128], index: 3, kind: input, shape index: {}]
  %s4 = inlined_call_operand.vmem [shape: f32[1,128], index: 4, kind: input, shape index: {}]
  %s5 = inlined_call_operand.hbm [shape: f32[8,128], index: 5, kind: output, shape index: {}]
  %s6 = sld [smem:[#allocation0]]
  $region42: #{tpu_custom_call.1} parent=0
    _
  %s8 = ssub.s32 1, %s6
  %s9 = scalar_select 0, %s8, %s6
  $region1: #{tpu_custom_call.1} parent=0
    #allocation2 [shape = 'u8[2048]{0}', space=vmem, size = 0x800, scoped, tag = 'input window, operand 0, single buffered']
    #allocation3 [shape = 's32[1]{0}', space=sflag, size = 0x4, scoped, tag = 'scoped memory for tpu_custom_call.1']
    #allocation4 [shape = 's32[1]{0}', space=sflag, size = 0x4, scoped, tag = 'scoped memory for tpu_custom_call.1']
    #allocation5 [shape = 'u8[4096]{0}', space=vmem, size = 0x1000, scoped, tag = 'input window, operand 1, single buffered']
    #allocation6 [shape = 's32[1]{0}', space=sflag, size = 0x4, scoped, tag = 'scoped memory for tpu_custom_call.1']
    #allocation7 [shape = 'u8[8192]{0}', space=vmem, size = 0x2000, scoped, tag = 'input window, operand 3, single buffered']
    #allocation8 [shape = 'u8[4096]{0}', space=vmem, size = 0x1000, scoped, tag = 'output window, operand 0, single buffered']
    %10 = vsyncpa [#allocation3], 0
    %11 = vsyncpa [#allocation6], 0
    %12 = vsyncpa [#allocation4], 0
    // Predicated region
    $region2: #{tpu_custom_call.1} parent=1 // pred_check
      _
    $region3: #{tpu_custom_call.1} parent=1 // pred_check_branch
      %14 = sbr.rel (0) target = $region5
    $region4: #{tpu_custom_call.1} parent=1 // pred_region
      %s16 = ssub.s32 64, 64
      %17 = vsyncadd [#allocation3], %s16
      %s19 = sshll.u32 [#allocation2], 4
      %s20 = int_to_ptr.vmem [resolvable:$true] %s19
      %22 = dma.hbm_to_vmem [thread:$0]  %s0, 64, %s20, [#allocation3]
    $region5: #{tpu_custom_call.1} parent=1 // pred_fallthru
      _
    // Predicated region
    $region6: #{tpu_custom_call.1} parent=1 // pred_check
      _
    $region7: #{tpu_custom_call.1} parent=1 // pred_check_branch
      %24 = sbr.rel (0) target = $region9
    $region8: #{tpu_custom_call.1} parent=1 // pred_region
      %s26 = ssub.s32 128, 128
      %27 = vsyncadd [#allocation6], %s26
      %s28 = sshll.u32 [#allocation5], 4
      %s29 = int_to_ptr.vmem [resolvable:$true] %s28
      %34 = dma.hbm_to_vmem [thread:$0]  %s1, 128, %s29, [#allocation6], 64, 64, 4
    $region9: #{tpu_custom_call.1} parent=1 // pred_fallthru
      _
    // Predicated region
    $region10: #{tpu_custom_call.1} parent=1 // pred_check
      _
    $region11: #{tpu_custom_call.1} parent=1 // pred_check_branch
      %36 = sbr.rel (0) target = $region13
    $region12: #{tpu_custom_call.1} parent=1 // pred_region
      _
    $region13: #{tpu_custom_call.1} parent=1 // pred_fallthru
      _
    // Predicated region
    $region14: #{tpu_custom_call.1} parent=1 // pred_check
      _
    $region15: #{tpu_custom_call.1} parent=1 // pred_check_branch
      %38 = sbr.rel (0) target = $region17
    $region16: #{tpu_custom_call.1} parent=1 // pred_region
      %s40 = ssub.s32 256, 256
      %41 = vsyncadd [#allocation6], %s40
      %s42 = sshll.u32 [#allocation7], 4
      %s43 = int_to_ptr.vmem [resolvable:$true] %s42
      %48 = dma.hbm_to_vmem [thread:$0]  %s3, 256, %s43, [#allocation6], 64, 64, 4
    $region17: #{tpu_custom_call.1} parent=1 // pred_fallthru
      _
    // Predicated region
    $region18: #{tpu_custom_call.1} parent=1 // pred_check
      _
    $region19: #{tpu_custom_call.1} parent=1 // pred_check_branch
      %50 = sbr.rel (0) target = $region21
    $region20: #{tpu_custom_call.1} parent=1 // pred_region
      _
    $region21: #{tpu_custom_call.1} parent=1 // pred_fallthru
      _
    // Predicated region
    $region22: #{tpu_custom_call.1} parent=1 // pred_check
      _
    $region23: #{tpu_custom_call.1} parent=1 // pred_check_branch
      %52 = sbr.rel (0) target = $region25
    $region24: #{tpu_custom_call.1} parent=1 // pred_region
      %53 = dma.done [#allocation3], 64
    $region25: #{tpu_custom_call.1} parent=1 // pred_fallthru
      _
    // Predicated region
    $region26: #{tpu_custom_call.1} parent=1 // pred_check
      _
    $region27: #{tpu_custom_call.1} parent=1 // pred_check_branch
      %55 = sbr.rel (0) target = $region29
    $region28: #{tpu_custom_call.1} parent=1 // pred_region
      %56 = dma.done [#allocation6], 128
    $region29: #{tpu_custom_call.1} parent=1 // pred_fallthru
      _
    // Predicated region
    $region30: #{tpu_custom_call.1} parent=1 // pred_check
      _
    $region31: #{tpu_custom_call.1} parent=1 // pred_check_branch
      %58 = sbr.rel (0) target = $region33
    $region32: #{tpu_custom_call.1} parent=1 // pred_region
      %59 = dma.done [#allocation6], 256
    $region33: #{tpu_custom_call.1} parent=1 // pred_fallthru
      _
    %v61 = vld [vmem:[#allocation2] sm:$0xf]
    %v62 = vld [vmem:[#allocation5] sm:$0xf]
    %v63 = vld [vmem:[#allocation5 + $0x4] sm:$0xf]
    %v64 = vld [vmem:[%s2] sm:$0x1]
    %v66 = vlaneseq
    %v67 = vshrl.u32 %v66, 7
    %v68 = vsub.s32 0, %v67
    %v69 = vrot.slane %v64, %v68
    %v73 = vunpack.c.l.b16 %v62
    %v74 = vunpack.c.l.b16 %v63
    %v75 = vpack.c.b16 %v74, %v73
    %vm77 = vcmask 130048
    %v79 = vsel %vm77, %v61, 0
    %81 = vmatprep.subr.bf16.mxu0 0
    %82 = vmatpush1.bf16.msra.mxu0 %v75
    %83 = vmatprep.subr.bf16.mxu0 0
    %84 = vmatpush1.bf16.msra.mxu0 0
    %85 = vmatprep.subr.bf16.mxu0 0
    %86 = vmatpush1.bf16.msra.mxu0 0
    %87 = vmatprep.subr.bf16.mxu0 0
    %88 = vmatpush1.bf16.msra.mxu0 0
    %89 = vmatprep.subr.bf16.mxu0 0
    %90 = vmatpush1.bf16.msra.mxu0 0
    %91 = vmatprep.subr.bf16.mxu0 0
    %92 = vmatpush1.bf16.msra.mxu0 0
    %93 = vmatprep.subr.bf16.mxu0 0
    %94 = vmatpush1.bf16.msra.mxu0 0
    %95 = vmatprep.subr.bf16.mxu0 0
    %96 = vmatpush1.bf16.msra.mxu0 0
    %97 = vmatprep.subr.bf16.mxu0 0
    %98 = vmatpush1.bf16.msra.mxu0 0
    %99 = vmatprep.subr.bf16.mxu0 0
    %100 = vmatpush1.bf16.msra.mxu0 0
    %101 = vmatprep.subr.bf16.mxu0 0
    %102 = vmatpush1.bf16.msra.mxu0 0
    %103 = vmatprep.subr.bf16.mxu0 0
    %104 = vmatpush1.bf16.msra.mxu0 0
    %105 = vmatprep.subr.bf16.mxu0 0
    %106 = vmatpush1.bf16.msra.mxu0 0
    %107 = vmatprep.subr.bf16.mxu0 0
    %108 = vmatpush1.bf16.msra.mxu0 0
    %109 = vmatprep.subr.bf16.mxu0 0
    %110 = vmatpush1.bf16.msra.mxu0 0
    %111 = vmatprep.subr.bf16.mxu0 0
    %112 = vmatpush1.bf16.msra.mxu0 0
    %113 = vmatprep.mubr.bf16.mxu0 0
    %114 = vmatmul.mubr.bf16.gmra.mrb[0].mxu0 %v79
    %v115 = vpop.f32.mrb[0].mxu0
    %v116 = vadd.f32 %v69, %v115
    %v117 = vpop.f32.mrb[0].mxu0
    %v118 = vpop.f32.mrb[0].mxu0
    %v119 = vpop.f32.mrb[0].mxu0
    %120 = vdwg.mxu0
    %v121 = vmax.f32 %v116, 0.0
    %v122 = vpack.c.bf16 %v121, %v121
    %v123 = vld [vmem:[#allocation7] sm:$0xf]
    %v124 = vld [vmem:[#allocation7 + $0x4] sm:$0xf]
    %v125 = vld [vmem:[#allocation7 + $0x8] sm:$0xf]
    %v126 = vld [vmem:[#allocation7 + $0xc] sm:$0xf]
    %v127 = vld [vmem:[%s4] sm:$0x1]
    %v129 = vlaneseq
    %v130 = vshrl.u32 %v129, 7
    %v131 = vsub.s32 0, %v130
    %v132 = vrot.slane %v127, %v131
    %v138 = vunpack.c.l.b16 %v123
    %v139 = vunpack.c.l.b16 %v124
    %v140 = vunpack.c.l.b16 %v125
    %v141 = vunpack.c.l.b16 %v126
    %v142 = vpack.c.b16 %v139, %v138
    %v143 = vpack.c.b16 %v141, %v140
    %vm146 = vcmask 261120
    %v148 = vsel %vm146, %v122, 0
    %150 = vmatprep.subr.bf16.mxu0 0
    %151 = vmatpush1.bf16.msra.mxu0 %v142
    %152 = vmatprep.subr.bf16.mxu0 0
    %153 = vmatpush1.bf16.msra.mxu0 %v143
    %154 = vmatprep.subr.bf16.mxu0 0
    %155 = vmatpush1.bf16.msra.mxu0 0
    %156 = vmatprep.subr.bf16.mxu0 0
    %157 = vmatpush1.bf16.msra.mxu0 0
    %158 = vmatprep.subr.bf16.mxu0 0
    %159 = vmatpush1.bf16.msra.mxu0 0
    %160 = vmatprep.subr.bf16.mxu0 0
    %161 = vmatpush1.bf16.msra.mxu0 0
    %162 = vmatprep.subr.bf16.mxu0 0
    %163 = vmatpush1.bf16.msra.mxu0 0
    %164 = vmatprep.subr.bf16.mxu0 0
    %165 = vmatpush1.bf16.msra.mxu0 0
    %166 = vmatprep.subr.bf16.mxu0 0
    %167 = vmatpush1.bf16.msra.mxu0 0
    %168 = vmatprep.subr.bf16.mxu0 0
    %169 = vmatpush1.bf16.msra.mxu0 0
    %170 = vmatprep.subr.bf16.mxu0 0
    %171 = vmatpush1.bf16.msra.mxu0 0
    %172 = vmatprep.subr.bf16.mxu0 0
    %173 = vmatpush1.bf16.msra.mxu0 0
    %174 = vmatprep.subr.bf16.mxu0 0
    %175 = vmatpush1.bf16.msra.mxu0 0
    %176 = vmatprep.subr.bf16.mxu0 0
    %177 = vmatpush1.bf16.msra.mxu0 0
    %178 = vmatprep.subr.bf16.mxu0 0
    %179 = vmatpush1.bf16.msra.mxu0 0
    %180 = vmatprep.subr.bf16.mxu0 0
    %181 = vmatpush1.bf16.msra.mxu0 0
    %182 = vmatprep.mubr.bf16.mxu0 0
    %183 = vmatmul.mubr.bf16.gmra.mrb[0].mxu0 %v148
    %v184 = vpop.f32.mrb[0].mxu0
    %v185 = vadd.f32 %v132, %v184
    %v186 = vpop.f32.mrb[0].mxu0
    %v187 = vpop.f32.mrb[0].mxu0
    %v188 = vpop.f32.mrb[0].mxu0
    %189 = vdwg.mxu0
    %v190 = vlaneseq
    %v191 = vand.u32 %v190, 127
    %vm192 = vcmp.ge.s32.totalorder %v191, 4
    %vm193 = vcmp.lt.s32.totalorder %v191, 8
    %vm194 = vmand %vm192, %vm193
    %v195 = vmin.f32 %v185, 20.0
    %vm196 = vcmp.gt.f32.partialorder %v185, 20.0
    %v197 = vmul.f32 %v195, 1.442695
    %v198 = vpow.pop %v197
    %v199 = vadd.f32 %v198, 1.0
    %v200 = vlog2.pop %v199
    %v201 = vmul.f32 %v200, 0.6931472
    %v202 = vmul.f32 -0.5, %v198
    %v203 = vadd.f32 %v202, 1.0
    %v204 = vmul.f32 %v203, %v198
    %v205 = vand.u32 2147483647, %v198
    %vm206 = vcmp.lt.f32.partialorder %v205, 0.0004427343
    %v207 = vsel %vm206, %v204, %v201
    %v208 = vsel %vm196, %v185, %v207
    %v209 = vsel %vm194, %v208, %v185
    %210 = vst [vmem:[#allocation8] sm:$0xff] %v209
    // Predicated region
    $region34: #{tpu_custom_call.1} parent=1 // pred_check
      _
    $region35: #{tpu_custom_call.1} parent=1 // pred_check_branch
      %212 = sbr.rel (0) target = $region37
    $region36: #{tpu_custom_call.1} parent=1 // pred_region
      %s214 = ssub.s32 128, 128
      %215 = vsyncadd [#allocation4], %s214
      %s217 = sshll.u32 [#allocation8], 4
      %s218 = int_to_ptr.vmem [resolvable:$true] %s217
      %220 = dma.vmem_to_hbm [thread:$0]  %s218, 128, %s5, [#allocation4]
    $region37: #{tpu_custom_call.1} parent=1 // pred_fallthru
      _
    // Predicated region
    $region38: #{tpu_custom_call.1} parent=1 // pred_check
      _
    $region39: #{tpu_custom_call.1} parent=1 // pred_check_branch
      %222 = sbr.rel (0) target = $region41
    $region40: #{tpu_custom_call.1} parent=1 // pred_region
      %223 = dma.done [#allocation4], 128
    $region41: #{tpu_custom_call.1} parent=1 // pred_fallthru
      _
    %224 = vsyncpa [#allocation3], 1
    %225 = vsyncpa [#allocation6], 1
    %226 = vsyncpa [#allocation4], 1

</llo_original>
